<compile_context>
chip_gen: v7x
topology: tpu7x:2x2x1
jax: 0.10.0
libtpu: 0.0.40
codegen_flags: <defaults>
</compile_context>

<pallas_src>
import functools

import jax
import jax.numpy as jnp
from jax.experimental import pallas as pl
from jax.experimental.pallas import tpu as pltpu

EPS = 1e-3


def _bn_kernel(x_ref, w_ref, b_ref, o_ref, *, bf16_bulk):
    # x_ref / o_ref: (N, TC, HW) block in native NCHW layout (channels on the
    # sublane axis, H*W on the lane axis).
    # w_ref / b_ref: (1, TC) lane-dense per-channel affine params.
    xb = x_ref[...]                                   # input dtype
    x = xb.astype(jnp.float32)
    n, tc, hw = x.shape
    inv_count = 1.0 / float(n * hw)

    # --- single fused statistics sweep (sum + sum-of-squares) --------------
    # var = E[x^2] - mean^2 in f32; mild cancellation risk when |mean| >> std
    # is accepted in exchange for dropping a full extra VPU sweep + temporary.
    s = jnp.sum(x, axis=0)                            # (TC, HW)   VPU adds
    ss = jnp.sum(x * x, axis=0)                       # (TC, HW)
    mean = jnp.sum(s, axis=1, keepdims=True) * inv_count   # (TC, 1)  XLU reduce
    ex2 = jnp.sum(ss, axis=1, keepdims=True) * inv_count   # (TC, 1)
    var = jnp.maximum(ex2 - mean * mean, 0.0)
    inv = jax.lax.rsqrt(var + EPS)                    # (TC, 1)   EUP

    # Params arrive lane-dense as (1, TC); transpose the two tiny vectors to
    # the (TC, 1) column form needed for the sublane broadcast.
    w = jnp.transpose(w_ref[...].astype(jnp.float32), (1, 0))   # (TC, 1)
    b = jnp.transpose(b_ref[...].astype(jnp.float32), (1, 0))   # (TC, 1)
    scale = inv * w                                   # (TC, 1)
    shift = b - mean * scale                          # (TC, 1)

    # --- fused normalize + affine bulk pass: y = x*scale + shift -----------
    if bf16_bulk:
        # v6e/v7x bf16 VPU: operate directly on the bf16 block.
        sc = scale.astype(xb.dtype)[None]
        sh = shift.astype(xb.dtype)[None]
        o_ref[...] = xb * sc + sh
    else:
        o_ref[...] = (x * scale[None] + shift[None]).astype(o_ref.dtype)


def _tpu_profile():
    """Returns (vmem_capacity_bytes, has_two_tensorcores, has_bf16_vpu)."""
    vmem_bytes = 64 << 20          # conservative default (v7x per-core)
    two_tc = False
    bf16_vpu = False
    try:
        info = pltpu.get_tpu_info()
        vmem_bytes = int(getattr(info, "vmem_capacity_bytes", vmem_bytes))
    except Exception:
        pass
    try:
        kind = jax.devices()[0].device_kind.lower()
        two_tc = any(t in kind for t in ("v4", "v5p", "v7"))   # 2 TCs / megacore
        bf16_vpu = any(t in kind for t in ("v6", "v7"))        # bf16 VALU
    except Exception:
        pass
    return vmem_bytes, two_tc, bf16_vpu


def _pick_tc(C, N, HW, *, max_block_bytes, prefer_multi):
    """Largest legal channel tile within the VMEM budget.

    tc must divide C and be either C itself or a multiple of 128 so that both
    the (N, tc, HW) activation block (sublane dim) and the lane-dense (1, tc)
    parameter block satisfy Mosaic's tiling constraints.  On 2-TensorCore
    chips prefer a grid >= 2 so the 'parallel' channel axis splits across
    cores; on single-core chips take the single largest tile (fewest grid
    steps, biggest DMAs).  Budget is in f32 bytes (independent of input dtype).
    """
    cands = sorted({d for d in range(128, C, 128) if C % d == 0} | {C}, reverse=True)
    for need_multi in ((True, False) if prefer_multi else (False,)):
        for tc in cands:
            if need_multi and C // tc < 2:
                continue
            if N * tc * HW * 4 <= max_block_bytes:
                return tc
    return cands[-1]


def batchnorm2d(x_nchw, weight, bias, *, tc=None):
    """BatchNorm2d forward (training statistics) via a Pallas TPU kernel.

    x_nchw: (N, C, H, W)   weight, bias: (C,)
    """
    N, C, H, W = x_nchw.shape
    HW = H * W
    vmem_bytes, two_tc, bf16_vpu = _tpu_profile()

    # Block budget: ~8 MiB on 128 MiB chips (v5e/v6e), ~4 MiB on 64 MiB (v7x).
    max_block_bytes = max(1 << 20, min(8 << 20, vmem_bytes // 16))
    if tc is None:
        # NOTE: pass tc= explicitly (e.g. 256-512) if a bundle dump ever shows
        # spill traffic at the largest tile.
        tc = _pick_tc(C, N, HW, max_block_bytes=max_block_bytes,
                      prefer_multi=two_tc)
    assert C % tc == 0, "channel tile must divide the channel count"

    # Free, contiguous reshapes only — no HBM transposes.
    x3 = x_nchw.reshape(N, C, HW)
    w2 = weight.reshape(1, C)
    b2 = bias.reshape(1, C)

    in_itemsize = jnp.dtype(x_nchw.dtype).itemsize
    io_block = N * tc * HW * in_itemsize
    f32_block = N * tc * HW * 4
    # Double-buffered in+out plus in-kernel f32 temporaries and params.
    footprint = 4 * io_block + 4 * f32_block + (4 << 20)
    vmem_limit = int(min(vmem_bytes * 3 // 4, max(32 << 20, footprint)))

    bf16_bulk = bool(bf16_vpu and x_nchw.dtype == jnp.bfloat16)
    kernel = functools.partial(_bn_kernel, bf16_bulk=bf16_bulk)

    out3 = pl.pallas_call(
        kernel,
        out_shape=jax.ShapeDtypeStruct((N, C, HW), x_nchw.dtype),
        grid_spec=pltpu.PrefetchScalarGridSpec(
            num_scalar_prefetch=0,
            grid=(C // tc,),
            in_specs=[
                pl.BlockSpec((N, tc, HW), lambda c: (0, c, 0)),
                pl.BlockSpec((1, tc), lambda c: (0, c)),
                pl.BlockSpec((1, tc), lambda c: (0, c)),
            ],
            out_specs=pl.BlockSpec((N, tc, HW), lambda c: (0, c, 0)),
        ),
        compiler_params=pltpu.CompilerParams(
            dimension_semantics=("parallel",),
            vmem_limit_bytes=vmem_limit,
        ),
        cost_estimate=pl.CostEstimate(
            flops=6 * N * C * HW,
            transcendentals=C,
            bytes_accessed=2 * N * C * HW * in_itemsize + 2 * C * 4,
        ),
    )(x3, w2, b2)

    return out3.reshape(N, C, H, W)


def _reference_bn(x_nchw, weight, bias):
    x = x_nchw.astype(jnp.float32)
    mean = jnp.mean(x, axis=(0, 2, 3), keepdims=True)
    var = jnp.mean((x - mean) ** 2, axis=(0, 2, 3), keepdims=True)
    w = weight.reshape(1, -1, 1, 1).astype(jnp.float32)
    b = bias.reshape(1, -1, 1, 1).astype(jnp.float32)
    return ((x - mean) * jax.lax.rsqrt(var + EPS) * w + b).astype(x_nchw.dtype)


if __name__ == "__main__":
    key = jax.random.PRNGKey(0)
    cases = [
        ((1, 288, 7, 7), jnp.float32),      # same layout family as 1x2304x7x7, scaled down
        ((2, 256, 16, 16), jnp.float32),    # lane-dense HW, batch > 1
        ((2, 256, 16, 16), jnp.bfloat16),   # bf16 bulk path (v6e/v7x), f32 stats
    ]
    for (N, C, H, W), dt in cases:
        key, kx = jax.random.split(key)
        x = jax.random.normal(kx, (N, C, H, W), dtype=jnp.float32).astype(dt)
        weight = 1.0 + 0.01 * jnp.arange(C, dtype=jnp.float32)
        bias = 0.001 * jnp.arange(C, dtype=jnp.float32)

        out = jax.block_until_ready(batchnorm2d(x, weight, bias))
        ref = _reference_bn(x, weight, bias)
        assert out.shape == (N, C, H, W)
        assert out.dtype == dt
        tol = 1e-4 if dt == jnp.float32 else 5e-2
        assert jnp.allclose(out.astype(jnp.float32), ref.astype(jnp.float32),
                            atol=tol, rtol=tol), ((N, C, H, W), dt)

    print("KERNEL_OK")
</pallas_src>

<mosaic_0001>
module attributes {stable_mosaic.version = 11 : i64} {
  func.func @_bn_kernel(%arg0: i32, %arg1: memref<1x288x49xf32, #tpu.memory_space<vmem>>, %arg2: memref<1x288xf32, #tpu.memory_space<vmem>>, %arg3: memref<1x288xf32, #tpu.memory_space<vmem>>, %arg4: memref<1x288x49xf32, #tpu.memory_space<vmem>>) attributes {dimension_semantics = [#tpu.dimension_semantics<parallel>], iteration_bounds = array<i64: 1>, scalar_prefetch = 0 : i64, scratch_operands = 0 : i64, tpu.core_type = #tpu.core_type<tc>, window_params = [{transform_indices = @transform_0, window_bounds = array<i64: 1, 288, 49>}, {transform_indices = @transform_1, window_bounds = array<i64: 1, 288>}, {transform_indices = @transform_2, window_bounds = array<i64: 1, 288>}, {transform_indices = @transform_3, window_bounds = array<i64: 1, 288, 49>}]} {
    %c0 = arith.constant 0 : index
    %c0_0 = arith.constant 0 : index
    %c0_1 = arith.constant 0 : index
    %0 = vector.load %arg1[%c0, %c0_0, %c0_1] : memref<1x288x49xf32, #tpu.memory_space<vmem>>, vector<1x288x49xf32>
    %cst = arith.constant dense<0.000000e+00> : vector<288x49xf32>
    %1 = vector.multi_reduction <add>, %0, %cst [0] : vector<1x288x49xf32> to vector<288x49xf32>
    %2 = arith.mulf %0, %0 : vector<1x288x49xf32>
    %cst_2 = arith.constant dense<0.000000e+00> : vector<288x49xf32>
    %3 = vector.multi_reduction <add>, %2, %cst_2 [0] : vector<1x288x49xf32> to vector<288x49xf32>
    %cst_3 = arith.constant dense<0.000000e+00> : vector<288xf32>
    %4 = vector.multi_reduction <add>, %1, %cst_3 [1] : vector<288x49xf32> to vector<288xf32>
    %5 = vector.shape_cast %4 : vector<288xf32> to vector<288x1xf32>
    %cst_4 = arith.constant 0.0204081628 : f32
    %6 = vector.broadcast %cst_4 : f32 to vector<288x1xf32>
    %7 = arith.mulf %5, %6 : vector<288x1xf32>
    %cst_5 = arith.constant dense<0.000000e+00> : vector<288xf32>
    %8 = vector.multi_reduction <add>, %3, %cst_5 [1] : vector<288x49xf32> to vector<288xf32>
    %9 = vector.shape_cast %8 : vector<288xf32> to vector<288x1xf32>
    %cst_6 = arith.constant 0.0204081628 : f32
    %10 = vector.broadcast %cst_6 : f32 to vector<288x1xf32>
    %11 = arith.mulf %9, %10 : vector<288x1xf32>
    %12 = arith.mulf %7, %7 : vector<288x1xf32>
    %13 = arith.subf %11, %12 : vector<288x1xf32>
    %cst_7 = arith.constant 0.000000e+00 : f32
    %14 = vector.broadcast %cst_7 : f32 to vector<288x1xf32>
    %15 = arith.maximumf %13, %14 : vector<288x1xf32>
    %cst_8 = arith.constant 1.000000e-03 : f32
    %16 = vector.broadcast %cst_8 : f32 to vector<288x1xf32>
    %17 = arith.addf %15, %16 : vector<288x1xf32>
    %18 = math.rsqrt %17 : vector<288x1xf32>
    %c0_9 = arith.constant 0 : index
    %c0_10 = arith.constant 0 : index
    %19 = vector.load %arg2[%c0_9, %c0_10] : memref<1x288xf32, #tpu.memory_space<vmem>>, vector<1x288xf32>
    %20 = tpu.transpose %19, [1, 0] : vector<1x288xf32> -> vector<288x1xf32>
    %c0_11 = arith.constant 0 : index
    %c0_12 = arith.constant 0 : index
    %21 = vector.load %arg3[%c0_11, %c0_12] : memref<1x288xf32, #tpu.memory_space<vmem>>, vector<1x288xf32>
    %22 = tpu.transpose %21, [1, 0] : vector<1x288xf32> -> vector<288x1xf32>
    %23 = arith.mulf %18, %20 : vector<288x1xf32>
    %24 = arith.mulf %7, %23 : vector<288x1xf32>
    %25 = arith.subf %22, %24 : vector<288x1xf32>
    %26 = vector.shape_cast %23 : vector<288x1xf32> to vector<1x288x1xf32>
    %27 = vector.broadcast %26 : vector<1x288x1xf32> to vector<1x288x49xf32>
    %28 = arith.mulf %0, %27 : vector<1x288x49xf32>
    %29 = vector.shape_cast %25 : vector<288x1xf32> to vector<1x288x1xf32>
    %30 = vector.broadcast %29 : vector<1x288x1xf32> to vector<1x288x49xf32>
    %31 = arith.addf %28, %30 : vector<1x288x49xf32>
    %c0_13 = arith.constant 0 : index
    %c0_14 = arith.constant 0 : index
    %c0_15 = arith.constant 0 : index
    %32 = vector.load %arg4[%c0_13, %c0_14, %c0_15] : memref<1x288x49xf32, #tpu.memory_space<vmem>>, vector<1x288x49xf32>
    tpu.vector_store %arg4[%c0_13, %c0_14, %c0_15], %31 {strides = array<i32>} : memref<1x288x49xf32, #tpu.memory_space<vmem>>, vector<1x288x49xf32>,
    return
  }
  func.func @transform_0(%arg0: i32) -> (i32, i32, i32) {
    %c0_i32 = arith.constant 0 : i32
    %c0_i32_0 = arith.constant 0 : i32
    %c0_i32_1 = arith.constant 0 : i32
    return %c0_i32, %arg0, %c0_i32_0 : i32, i32, i32
  }
  func.func @transform_1(%arg0: i32) -> (i32, i32) {
    %c0_i32 = arith.constant 0 : i32
    %c0_i32_0 = arith.constant 0 : i32
    return %c0_i32, %arg0 : i32, i32
  }
  func.func @transform_2(%arg0: i32) -> (i32, i32) {
    %c0_i32 = arith.constant 0 : i32
    %c0_i32_0 = arith.constant 0 : i32
    return %c0_i32, %arg0 : i32, i32
  }
  func.func @transform_3(%arg0: i32) -> (i32, i32, i32) {
    %c0_i32 = arith.constant 0 : i32
    %c0_i32_0 = arith.constant 0 : i32
    %c0_i32_1 = arith.constant 0 : i32
    return %c0_i32, %arg0, %c0_i32_0 : i32, i32, i32
  }
}

</mosaic_0001>

<llo_original>
// kernel: tpu_custom_call.1
$region0: #{tpu_custom_call.1}
  #allocation0 [shape = 'u32[]', space=smem, size = 0x4, offset = 0x4, fixed_abs, tag = 'smem constant byte address 0x4 - core index']
  #allocation1 [shape = 'u32[144,128]{1,0:T(1,128)}', space=vmem, size = 0x12000, scoped, tag = 'internal scratch']
  %s0 = inlined_call_operand.vmem [shape: f32[1,288,49], index: 0, kind: input, shape index: {}]
  %s1 = inlined_call_operand.vmem [shape: f32[1,288], index: 1, kind: input, shape index: {}]
  %s2 = inlined_call_operand.vmem [shape: f32[1,288], index: 2, kind: input, shape index: {}]
  %s3 = inlined_call_operand.vmem [shape: f32[1,288,49], index: 3, kind: output, shape index: {}]
  %s4 = sld [smem:[#allocation0]]
  $region22: #{tpu_custom_call.1} parent=0
    _
  %s6 = ssub.s32 1, %s4
  %s7 = scalar_select 0, %s6, %s4
  // Predicated region
  $region2: #{tpu_custom_call.1} parent=0 // pred_check
    _
  $region3: #{tpu_custom_call.1} parent=0 // pred_check_branch
    %9 = sbr.rel (0) target = $region5
  $region4: #{tpu_custom_call.1} parent=0 // pred_region
    _
  $region5: #{tpu_custom_call.1} parent=0 // pred_fallthru
    _
  // Predicated region
  $region6: #{tpu_custom_call.1} parent=0 // pred_check
    _
  $region7: #{tpu_custom_call.1} parent=0 // pred_check_branch
    %11 = sbr.rel (0) target = $region9
  $region8: #{tpu_custom_call.1} parent=0 // pred_region
    _
  $region9: #{tpu_custom_call.1} parent=0 // pred_fallthru
    _
  // Predicated region
  $region10: #{tpu_custom_call.1} parent=0 // pred_check
    _
  $region11: #{tpu_custom_call.1} parent=0 // pred_check_branch
    %13 = sbr.rel (0) target = $region13
  $region12: #{tpu_custom_call.1} parent=0 // pred_region
    _
  $region13: #{tpu_custom_call.1} parent=0 // pred_fallthru
    _
  %v14 = vld [vmem:[%s0] sm:$0xff]
  %v15 = vld [vmem:[%s0 + $0x8] sm:$0xff]
  %v16 = vld [vmem:[%s0 + $0x10] sm:$0xff]
  %v17 = vld [vmem:[%s0 + $0x18] sm:$0xff]
  %v18 = vld [vmem:[%s0 + $0x20] sm:$0xff]
  %v19 = vld [vmem:[%s0 + $0x28] sm:$0xff]
  %v20 = vld [vmem:[%s0 + $0x30] sm:$0xff]
  %v21 = vld [vmem:[%s0 + $0x38] sm:$0xff]
  %v22 = vld [vmem:[%s0 + $0x40] sm:$0xff]
  %v23 = vld [vmem:[%s0 + $0x48] sm:$0xff]
  %v24 = vld [vmem:[%s0 + $0x50] sm:$0xff]
  %v25 = vld [vmem:[%s0 + $0x58] sm:$0xff]
  %v26 = vld [vmem:[%s0 + $0x60] sm:$0xff]
  %v27 = vld [vmem:[%s0 + $0x68] sm:$0xff]
  %v28 = vld [vmem:[%s0 + $0x70] sm:$0xff]
  %v29 = vld [vmem:[%s0 + $0x78] sm:$0xff]
  %v30 = vld [vmem:[%s0 + $0x80] sm:$0xff]
  %v31 = vld [vmem:[%s0 + $0x88] sm:$0xff]
  %v32 = vld [vmem:[%s0 + $0x90] sm:$0xff]
  %v33 = vld [vmem:[%s0 + $0x98] sm:$0xff]
  %v34 = vld [vmem:[%s0 + $0xa0] sm:$0xff]
  %v35 = vld [vmem:[%s0 + $0xa8] sm:$0xff]
  %v36 = vld [vmem:[%s0 + $0xb0] sm:$0xff]
  %v37 = vld [vmem:[%s0 + $0xb8] sm:$0xff]
  %v38 = vld [vmem:[%s0 + $0xc0] sm:$0xff]
  %v39 = vld [vmem:[%s0 + $0xc8] sm:$0xff]
  %v40 = vld [vmem:[%s0 + $0xd0] sm:$0xff]
  %v41 = vld [vmem:[%s0 + $0xd8] sm:$0xff]
  %v42 = vld [vmem:[%s0 + $0xe0] sm:$0xff]
  %v43 = vld [vmem:[%s0 + $0xe8] sm:$0xff]
  %v44 = vld [vmem:[%s0 + $0xf0] sm:$0xff]
  %v45 = vld [vmem:[%s0 + $0xf8] sm:$0xff]
  %v46 = vld [vmem:[%s0 + $0x100] sm:$0xff]
  %v47 = vld [vmem:[%s0 + $0x108] sm:$0xff]
  %v48 = vld [vmem:[%s0 + $0x110] sm:$0xff]
  %v49 = vld [vmem:[%s0 + $0x118] sm:$0xff]
  %v50 = vadd.f32 %v14, 0.0
  %v51 = vadd.f32 %v15, 0.0
  %v52 = vadd.f32 %v16, 0.0
  %v53 = vadd.f32 %v17, 0.0
  %v54 = vadd.f32 %v18, 0.0
  %v55 = vadd.f32 %v19, 0.0
  %v56 = vadd.f32 %v20, 0.0
  %v57 = vadd.f32 %v21, 0.0
  %v58 = vadd.f32 %v22, 0.0
  %v59 = vadd.f32 %v23, 0.0
  %v60 = vadd.f32 %v24, 0.0
  %v61 = vadd.f32 %v25, 0.0
  %v62 = vadd.f32 %v26, 0.0
  %v63 = vadd.f32 %v27, 0.0
  %v64 = vadd.f32 %v28, 0.0
  %v65 = vadd.f32 %v29, 0.0
  %v66 = vadd.f32 %v30, 0.0
  %v67 = vadd.f32 %v31, 0.0
  %v68 = vadd.f32 %v32, 0.0
  %v69 = vadd.f32 %v33, 0.0
  %v70 = vadd.f32 %v34, 0.0
  %v71 = vadd.f32 %v35, 0.0
  %v72 = vadd.f32 %v36, 0.0
  %v73 = vadd.f32 %v37, 0.0
  %v74 = vadd.f32 %v38, 0.0
  %v75 = vadd.f32 %v39, 0.0
  %v76 = vadd.f32 %v40, 0.0
  %v77 = vadd.f32 %v41, 0.0
  %v78 = vadd.f32 %v42, 0.0
  %v79 = vadd.f32 %v43, 0.0
  %v80 = vadd.f32 %v44, 0.0
  %v81 = vadd.f32 %v45, 0.0
  %v82 = vadd.f32 %v46, 0.0
  %v83 = vadd.f32 %v47, 0.0
  %v84 = vadd.f32 %v48, 0.0
  %v85 = vadd.f32 %v49, 0.0
  %v86 = vmul.f32 %v14, %v14
  %v87 = vmul.f32 %v15, %v15
  %v88 = vmul.f32 %v16, %v16
  %v89 = vmul.f32 %v17, %v17
  %v90 = vmul.f32 %v18, %v18
  %v91 = vmul.f32 %v19, %v19
  %v92 = vmul.f32 %v20, %v20
  %v93 = vmul.f32 %v21, %v21
  %v94 = vmul.f32 %v22, %v22
  %v95 = vmul.f32 %v23, %v23
  %v96 = vmul.f32 %v24, %v24
  %v97 = vmul.f32 %v25, %v25
  %v98 = vmul.f32 %v26, %v26
  %v99 = vmul.f32 %v27, %v27
  %v100 = vmul.f32 %v28, %v28
  %v101 = vmul.f32 %v29, %v29
  %v102 = vmul.f32 %v30, %v30
  %v103 = vmul.f32 %v31, %v31
  %v104 = vmul.f32 %v32, %v32
  %v105 = vmul.f32 %v33, %v33
  %v106 = vmul.f32 %v34, %v34
  %v107 = vmul.f32 %v35, %v35
  %v108 = vmul.f32 %v36, %v36
  %v109 = vmul.f32 %v37, %v37
  %v110 = vmul.f32 %v38, %v38
  %v111 = vmul.f32 %v39, %v39
  %v112 = vmul.f32 %v40, %v40
  %v113 = vmul.f32 %v41, %v41
  %v114 = vmul.f32 %v42, %v42
  %v115 = vmul.f32 %v43, %v43
  %v116 = vmul.f32 %v44, %v44
  %v117 = vmul.f32 %v45, %v45
  %v118 = vmul.f32 %v46, %v46
  %v119 = vmul.f32 %v47, %v47
  %v120 = vmul.f32 %v48, %v48
  %v121 = vmul.f32 %v49, %v49
  %v122 = vadd.f32 %v86, 0.0
  %v123 = vadd.f32 %v87, 0.0
  %v124 = vadd.f32 %v88, 0.0
  %v125 = vadd.f32 %v89, 0.0
  %v126 = vadd.f32 %v90, 0.0
  %v127 = vadd.f32 %v91, 0.0
  %v128 = vadd.f32 %v92, 0.0
  %v129 = vadd.f32 %v93, 0.0
  %v130 = vadd.f32 %v94, 0.0
  %v131 = vadd.f32 %v95, 0.0
  %v132 = vadd.f32 %v96, 0.0
  %v133 = vadd.f32 %v97, 0.0
  %v134 = vadd.f32 %v98, 0.0
  %v135 = vadd.f32 %v99, 0.0
  %v136 = vadd.f32 %v100, 0.0
  %v137 = vadd.f32 %v101, 0.0
  %v138 = vadd.f32 %v102, 0.0
  %v139 = vadd.f32 %v103, 0.0
  %v140 = vadd.f32 %v104, 0.0
  %v141 = vadd.f32 %v105, 0.0
  %v142 = vadd.f32 %v106, 0.0
  %v143 = vadd.f32 %v107, 0.0
  %v144 = vadd.f32 %v108, 0.0
  %v145 = vadd.f32 %v109, 0.0
  %v146 = vadd.f32 %v110, 0.0
  %v147 = vadd.f32 %v111, 0.0
  %v148 = vadd.f32 %v112, 0.0
  %v149 = vadd.f32 %v113, 0.0
  %v150 = vadd.f32 %v114, 0.0
  %v151 = vadd.f32 %v115, 0.0
  %v152 = vadd.f32 %v116, 0.0
  %v153 = vadd.f32 %v117, 0.0
  %v154 = vadd.f32 %v118, 0.0
  %v155 = vadd.f32 %v119, 0.0
  %v156 = vadd.f32 %v120, 0.0
  %v157 = vadd.f32 %v121, 0.0
  %vm158 = vcmask 400384
  %v159 = vsel %vm158, %v50, 0.0
  %160 = vadd.xlane.f32.xlu0 %v159
  %v161 = vpop.xlane.xlu0 %160
  %v162 = vsel %vm158, %v51, 0.0
  %163 = vadd.xlane.f32.xlu0 %v162
  %v164 = vpop.xlane.xlu0 %163
  %v165 = vsel %vm158, %v52, 0.0
  %166 = vadd.xlane.f32.xlu0 %v165
  %v167 = vpop.xlane.xlu0 %166
  %v168 = vsel %vm158, %v53, 0.0
  %169 = vadd.xlane.f32.xlu0 %v168
  %v170 = vpop.xlane.xlu0 %169
  %v171 = vsel %vm158, %v54, 0.0
  %172 = vadd.xlane.f32.xlu0 %v171
  %v173 = vpop.xlane.xlu0 %172
  %v174 = vsel %vm158, %v55, 0.0
  %175 = vadd.xlane.f32.xlu0 %v174
  %v176 = vpop.xlane.xlu0 %175
  %v177 = vsel %vm158, %v56, 0.0
  %178 = vadd.xlane.f32.xlu0 %v177
  %v179 = vpop.xlane.xlu0 %178
  %v180 = vsel %vm158, %v57, 0.0
  %181 = vadd.xlane.f32.xlu0 %v180
  %v182 = vpop.xlane.xlu0 %181
  %v183 = vsel %vm158, %v58, 0.0
  %184 = vadd.xlane.f32.xlu0 %v183
  %v185 = vpop.xlane.xlu0 %184
  %v186 = vsel %vm158, %v59, 0.0
  %187 = vadd.xlane.f32.xlu0 %v186
  %v188 = vpop.xlane.xlu0 %187
  %v189 = vsel %vm158, %v60, 0.0
  %190 = vadd.xlane.f32.xlu0 %v189
  %v191 = vpop.xlane.xlu0 %190
  %v192 = vsel %vm158, %v61, 0.0
  %193 = vadd.xlane.f32.xlu0 %v192
  %v194 = vpop.xlane.xlu0 %193
  %v195 = vsel %vm158, %v62, 0.0
  %196 = vadd.xlane.f32.xlu0 %v195
  %v197 = vpop.xlane.xlu0 %196
  %v198 = vsel %vm158, %v63, 0.0
  %199 = vadd.xlane.f32.xlu0 %v198
  %v200 = vpop.xlane.xlu0 %199
  %v201 = vsel %vm158, %v64, 0.0
  %202 = vadd.xlane.f32.xlu0 %v201
  %v203 = vpop.xlane.xlu0 %202
  %v204 = vsel %vm158, %v65, 0.0
  %205 = vadd.xlane.f32.xlu0 %v204
  %v206 = vpop.xlane.xlu0 %205
  %v207 = vsel %vm158, %v66, 0.0
  %208 = vadd.xlane.f32.xlu0 %v207
  %v209 = vpop.xlane.xlu0 %208
  %v210 = vsel %vm158, %v67, 0.0
  %211 = vadd.xlane.f32.xlu0 %v210
  %v212 = vpop.xlane.xlu0 %211
  %v213 = vsel %vm158, %v68, 0.0
  %214 = vadd.xlane.f32.xlu0 %v213
  %v215 = vpop.xlane.xlu0 %214
  %v216 = vsel %vm158, %v69, 0.0
  %217 = vadd.xlane.f32.xlu0 %v216
  %v218 = vpop.xlane.xlu0 %217
  %v219 = vsel %vm158, %v70, 0.0
  %220 = vadd.xlane.f32.xlu0 %v219
  %v221 = vpop.xlane.xlu0 %220
  %v222 = vsel %vm158, %v71, 0.0
  %223 = vadd.xlane.f32.xlu0 %v222
  %v224 = vpop.xlane.xlu0 %223
  %v225 = vsel %vm158, %v72, 0.0
  %226 = vadd.xlane.f32.xlu0 %v225
  %v227 = vpop.xlane.xlu0 %226
  %v228 = vsel %vm158, %v73, 0.0
  %229 = vadd.xlane.f32.xlu0 %v228
  %v230 = vpop.xlane.xlu0 %229
  %v231 = vsel %vm158, %v74, 0.0
  %232 = vadd.xlane.f32.xlu0 %v231
  %v233 = vpop.xlane.xlu0 %232
  %v234 = vsel %vm158, %v75, 0.0
  %235 = vadd.xlane.f32.xlu0 %v234
  %v236 = vpop.xlane.xlu0 %235
  %v237 = vsel %vm158, %v76, 0.0
  %238 = vadd.xlane.f32.xlu0 %v237
  %v239 = vpop.xlane.xlu0 %238
  %v240 = vsel %vm158, %v77, 0.0
  %241 = vadd.xlane.f32.xlu0 %v240
  %v242 = vpop.xlane.xlu0 %241
  %v243 = vsel %vm158, %v78, 0.0
  %244 = vadd.xlane.f32.xlu0 %v243
  %v245 = vpop.xlane.xlu0 %244
  %v246 = vsel %vm158, %v79, 0.0
  %247 = vadd.xlane.f32.xlu0 %v246
  %v248 = vpop.xlane.xlu0 %247
  %v249 = vsel %vm158, %v80, 0.0
  %250 = vadd.xlane.f32.xlu0 %v249
  %v251 = vpop.xlane.xlu0 %250
  %v252 = vsel %vm158, %v81, 0.0
  %253 = vadd.xlane.f32.xlu0 %v252
  %v254 = vpop.xlane.xlu0 %253
  %v255 = vsel %vm158, %v82, 0.0
  %256 = vadd.xlane.f32.xlu0 %v255
  %v257 = vpop.xlane.xlu0 %256
  %v258 = vsel %vm158, %v83, 0.0
  %259 = vadd.xlane.f32.xlu0 %v258
  %v260 = vpop.xlane.xlu0 %259
  %v261 = vsel %vm158, %v84, 0.0
  %262 = vadd.xlane.f32.xlu0 %v261
  %v263 = vpop.xlane.xlu0 %262
  %v264 = vsel %vm158, %v85, 0.0
  %265 = vadd.xlane.f32.xlu0 %v264
  %v266 = vpop.xlane.xlu0 %265
  %v267 = vmul.f32 %v161, 0.020408163
  %v268 = vmul.f32 %v164, 0.020408163
  %v269 = vmul.f32 %v167, 0.020408163
  %v270 = vmul.f32 %v170, 0.020408163
  %v271 = vmul.f32 %v173, 0.020408163
  %v272 = vmul.f32 %v176, 0.020408163
  %v273 = vmul.f32 %v179, 0.020408163
  %v274 = vmul.f32 %v182, 0.020408163
  %v275 = vmul.f32 %v185, 0.020408163
  %v276 = vmul.f32 %v188, 0.020408163
  %v277 = vmul.f32 %v191, 0.020408163
  %v278 = vmul.f32 %v194, 0.020408163
  %v279 = vmul.f32 %v197, 0.020408163
  %v280 = vmul.f32 %v200, 0.020408163
  %v281 = vmul.f32 %v203, 0.020408163
  %v282 = vmul.f32 %v206, 0.020408163
  %v283 = vmul.f32 %v209, 0.020408163
  %v284 = vmul.f32 %v212, 0.020408163
  %v285 = vmul.f32 %v215, 0.020408163
  %v286 = vmul.f32 %v218, 0.020408163
  %v287 = vmul.f32 %v221, 0.020408163
  %v288 = vmul.f32 %v224, 0.020408163
  %v289 = vmul.f32 %v227, 0.020408163
  %v290 = vmul.f32 %v230, 0.020408163
  %v291 = vmul.f32 %v233, 0.020408163
  %v292 = vmul.f32 %v236, 0.020408163
  %v293 = vmul.f32 %v239, 0.020408163
  %v294 = vmul.f32 %v242, 0.020408163
  %v295 = vmul.f32 %v245, 0.020408163
  %v296 = vmul.f32 %v248, 0.020408163
  %v297 = vmul.f32 %v251, 0.020408163
  %v298 = vmul.f32 %v254, 0.020408163
  %v299 = vmul.f32 %v257, 0.020408163
  %v300 = vmul.f32 %v260, 0.020408163
  %v301 = vmul.f32 %v263, 0.020408163
  %v302 = vmul.f32 %v266, 0.020408163
  %v303 = vsel %vm158, %v122, 0.0
  %304 = vadd.xlane.f32.xlu0 %v303
  %v305 = vpop.xlane.xlu0 %304
  %v306 = vsel %vm158, %v123, 0.0
  %307 = vadd.xlane.f32.xlu0 %v306
  %v308 = vpop.xlane.xlu0 %307
  %v309 = vsel %vm158, %v124, 0.0
  %310 = vadd.xlane.f32.xlu0 %v309
  %v311 = vpop.xlane.xlu0 %310
  %v312 = vsel %vm158, %v125, 0.0
  %313 = vadd.xlane.f32.xlu0 %v312
  %v314 = vpop.xlane.xlu0 %313
  %v315 = vsel %vm158, %v126, 0.0
  %316 = vadd.xlane.f32.xlu0 %v315
  %v317 = vpop.xlane.xlu0 %316
  %v318 = vsel %vm158, %v127, 0.0
  %319 = vadd.xlane.f32.xlu0 %v318
  %v320 = vpop.xlane.xlu0 %319
  %v321 = vsel %vm158, %v128, 0.0
  %322 = vadd.xlane.f32.xlu0 %v321
  %v323 = vpop.xlane.xlu0 %322
  %v324 = vsel %vm158, %v129, 0.0
  %325 = vadd.xlane.f32.xlu0 %v324
  %v326 = vpop.xlane.xlu0 %325
  %v327 = vsel %vm158, %v130, 0.0
  %328 = vadd.xlane.f32.xlu0 %v327
  %v329 = vpop.xlane.xlu0 %328
  %v330 = vsel %vm158, %v131, 0.0
  %331 = vadd.xlane.f32.xlu0 %v330
  %v332 = vpop.xlane.xlu0 %331
  %v333 = vsel %vm158, %v132, 0.0
  %334 = vadd.xlane.f32.xlu0 %v333
  %v335 = vpop.xlane.xlu0 %334
  %v336 = vsel %vm158, %v133, 0.0
  %337 = vadd.xlane.f32.xlu0 %v336
  %v338 = vpop.xlane.xlu0 %337
  %v339 = vsel %vm158, %v134, 0.0
  %340 = vadd.xlane.f32.xlu0 %v339
  %v341 = vpop.xlane.xlu0 %340
  %v342 = vsel %vm158, %v135, 0.0
  %343 = vadd.xlane.f32.xlu0 %v342
  %v344 = vpop.xlane.xlu0 %343
  %v345 = vsel %vm158, %v136, 0.0
  %346 = vadd.xlane.f32.xlu0 %v345
  %v347 = vpop.xlane.xlu0 %346
  %v348 = vsel %vm158, %v137, 0.0
  %349 = vadd.xlane.f32.xlu0 %v348
  %v350 = vpop.xlane.xlu0 %349
  %v351 = vsel %vm158, %v138, 0.0
  %352 = vadd.xlane.f32.xlu0 %v351
  %v353 = vpop.xlane.xlu0 %352
  %v354 = vsel %vm158, %v139, 0.0
  %355 = vadd.xlane.f32.xlu0 %v354
  %v356 = vpop.xlane.xlu0 %355
  %v357 = vsel %vm158, %v140, 0.0
  %358 = vadd.xlane.f32.xlu0 %v357
  %v359 = vpop.xlane.xlu0 %358
  %v360 = vsel %vm158, %v141, 0.0
  %361 = vadd.xlane.f32.xlu0 %v360
  %v362 = vpop.xlane.xlu0 %361
  %v363 = vsel %vm158, %v142, 0.0
  %364 = vadd.xlane.f32.xlu0 %v363
  %v365 = vpop.xlane.xlu0 %364
  %v366 = vsel %vm158, %v143, 0.0
  %367 = vadd.xlane.f32.xlu0 %v366
  %v368 = vpop.xlane.xlu0 %367
  %v369 = vsel %vm158, %v144, 0.0
  %370 = vadd.xlane.f32.xlu0 %v369
  %v371 = vpop.xlane.xlu0 %370
  %v372 = vsel %vm158, %v145, 0.0
  %373 = vadd.xlane.f32.xlu0 %v372
  %v374 = vpop.xlane.xlu0 %373
  %v375 = vsel %vm158, %v146, 0.0
  %376 = vadd.xlane.f32.xlu0 %v375
  %v377 = vpop.xlane.xlu0 %376
  %v378 = vsel %vm158, %v147, 0.0
  %379 = vadd.xlane.f32.xlu0 %v378
  %v380 = vpop.xlane.xlu0 %379
  %v381 = vsel %vm158, %v148, 0.0
  %382 = vadd.xlane.f32.xlu0 %v381
  %v383 = vpop.xlane.xlu0 %382
  %v384 = vsel %vm158, %v149, 0.0
  %385 = vadd.xlane.f32.xlu0 %v384
  %v386 = vpop.xlane.xlu0 %385
  %v387 = vsel %vm158, %v150, 0.0
  %388 = vadd.xlane.f32.xlu0 %v387
  %v389 = vpop.xlane.xlu0 %388
  %v390 = vsel %vm158, %v151, 0.0
  %391 = vadd.xlane.f32.xlu0 %v390
  %v392 = vpop.xlane.xlu0 %391
  %v393 = vsel %vm158, %v152, 0.0
  %394 = vadd.xlane.f32.xlu0 %v393
  %v395 = vpop.xlane.xlu0 %394
  %v396 = vsel %vm158, %v153, 0.0
  %397 = vadd.xlane.f32.xlu0 %v396
  %v398 = vpop.xlane.xlu0 %397
  %v399 = vsel %vm158, %v154, 0.0
  %400 = vadd.xlane.f32.xlu0 %v399
  %v401 = vpop.xlane.xlu0 %400
  %v402 = vsel %vm158, %v155, 0.0
  %403 = vadd.xlane.f32.xlu0 %v402
  %v404 = vpop.xlane.xlu0 %403
  %v405 = vsel %vm158, %v156, 0.0
  %406 = vadd.xlane.f32.xlu0 %v405
  %v407 = vpop.xlane.xlu0 %406
  %v408 = vsel %vm158, %v157, 0.0
  %409 = vadd.xlane.f32.xlu0 %v408
  %v410 = vpop.xlane.xlu0 %409
  %v411 = vmul.f32 %v305, 0.020408163
  %v412 = vmul.f32 %v308, 0.020408163
  %v413 = vmul.f32 %v311, 0.020408163
  %v414 = vmul.f32 %v314, 0.020408163
  %v415 = vmul.f32 %v317, 0.020408163
  %v416 = vmul.f32 %v320, 0.020408163
  %v417 = vmul.f32 %v323, 0.020408163
  %v418 = vmul.f32 %v326, 0.020408163
  %v419 = vmul.f32 %v329, 0.020408163
  %v420 = vmul.f32 %v332, 0.020408163
  %v421 = vmul.f32 %v335, 0.020408163
  %v422 = vmul.f32 %v338, 0.020408163
  %v423 = vmul.f32 %v341, 0.020408163
  %v424 = vmul.f32 %v344, 0.020408163
  %v425 = vmul.f32 %v347, 0.020408163
  %v426 = vmul.f32 %v350, 0.020408163
  %v427 = vmul.f32 %v353, 0.020408163
  %v428 = vmul.f32 %v356, 0.020408163
  %v429 = vmul.f32 %v359, 0.020408163
  %v430 = vmul.f32 %v362, 0.020408163
  %v431 = vmul.f32 %v365, 0.020408163
  %v432 = vmul.f32 %v368, 0.020408163
  %v433 = vmul.f32 %v371, 0.020408163
  %v434 = vmul.f32 %v374, 0.020408163
  %v435 = vmul.f32 %v377, 0.020408163
  %v436 = vmul.f32 %v380, 0.020408163
  %v437 = vmul.f32 %v383, 0.020408163
  %v438 = vmul.f32 %v386, 0.020408163
  %v439 = vmul.f32 %v389, 0.020408163
  %v440 = vmul.f32 %v392, 0.020408163
  %v441 = vmul.f32 %v395, 0.020408163
  %v442 = vmul.f32 %v398, 0.020408163
  %v443 = vmul.f32 %v401, 0.020408163
  %v444 = vmul.f32 %v404, 0.020408163
  %v445 = vmul.f32 %v407, 0.020408163
  %v446 = vmul.f32 %v410, 0.020408163
  %v447 = vmul.f32 %v267, %v267
  %v448 = vmul.f32 %v268, %v268
  %v449 = vmul.f32 %v269, %v269
  %v450 = vmul.f32 %v270, %v270
  %v451 = vmul.f32 %v271, %v271
  %v452 = vmul.f32 %v272, %v272
  %v453 = vmul.f32 %v273, %v273
  %v454 = vmul.f32 %v274, %v274
  %v455 = vmul.f32 %v275, %v275
  %v456 = vmul.f32 %v276, %v276
  %v457 = vmul.f32 %v277, %v277
  %v458 = vmul.f32 %v278, %v278
  %v459 = vmul.f32 %v279, %v279
  %v460 = vmul.f32 %v280, %v280
  %v461 = vmul.f32 %v281, %v281
  %v462 = vmul.f32 %v282, %v282
  %v463 = vmul.f32 %v283, %v283
  %v464 = vmul.f32 %v284, %v284
  %v465 = vmul.f32 %v285, %v285
  %v466 = vmul.f32 %v286, %v286
  %v467 = vmul.f32 %v287, %v287
  %v468 = vmul.f32 %v288, %v288
  %v469 = vmul.f32 %v289, %v289
  %v470 = vmul.f32 %v290, %v290
  %v471 = vmul.f32 %v291, %v291
  %v472 = vmul.f32 %v292, %v292
  %v473 = vmul.f32 %v293, %v293
  %v474 = vmul.f32 %v294, %v294
  %v475 = vmul.f32 %v295, %v295
  %v476 = vmul.f32 %v296, %v296
  %v477 = vmul.f32 %v297, %v297
  %v478 = vmul.f32 %v298, %v298
  %v479 = vmul.f32 %v299, %v299
  %v480 = vmul.f32 %v300, %v300
  %v481 = vmul.f32 %v301, %v301
  %v482 = vmul.f32 %v302, %v302
  %v483 = vsub.f32 %v411, %v447
  %v484 = vsub.f32 %v412, %v448
  %v485 = vsub.f32 %v413, %v449
  %v486 = vsub.f32 %v414, %v450
  %v487 = vsub.f32 %v415, %v451
  %v488 = vsub.f32 %v416, %v452
  %v489 = vsub.f32 %v417, %v453
  %v490 = vsub.f32 %v418, %v454
  %v491 = vsub.f32 %v419, %v455
  %v492 = vsub.f32 %v420, %v456
  %v493 = vsub.f32 %v421, %v457
  %v494 = vsub.f32 %v422, %v458
  %v495 = vsub.f32 %v423, %v459
  %v496 = vsub.f32 %v424, %v460
  %v497 = vsub.f32 %v425, %v461
  %v498 = vsub.f32 %v426, %v462
  %v499 = vsub.f32 %v427, %v463
  %v500 = vsub.f32 %v428, %v464
  %v501 = vsub.f32 %v429, %v465
  %v502 = vsub.f32 %v430, %v466
  %v503 = vsub.f32 %v431, %v467
  %v504 = vsub.f32 %v432, %v468
  %v505 = vsub.f32 %v433, %v469
  %v506 = vsub.f32 %v434, %v470
  %v507 = vsub.f32 %v435, %v471
  %v508 = vsub.f32 %v436, %v472
  %v509 = vsub.f32 %v437, %v473
  %v510 = vsub.f32 %v438, %v474
  %v511 = vsub.f32 %v439, %v475
  %v512 = vsub.f32 %v440, %v476
  %v513 = vsub.f32 %v441, %v477
  %v514 = vsub.f32 %v442, %v478
  %v515 = vsub.f32 %v443, %v479
  %v516 = vsub.f32 %v444, %v480
  %v517 = vsub.f32 %v445, %v481
  %v518 = vsub.f32 %v446, %v482
  %v519 = vmax.f32 %v483, 0.0
  %v520 = vmax.f32 %v484, 0.0
  %v521 = vmax.f32 %v485, 0.0
  %v522 = vmax.f32 %v486, 0.0
  %v523 = vmax.f32 %v487, 0.0
  %v524 = vmax.f32 %v488, 0.0
  %v525 = vmax.f32 %v489, 0.0
  %v526 = vmax.f32 %v490, 0.0
  %v527 = vmax.f32 %v491, 0.0
  %v528 = vmax.f32 %v492, 0.0
  %v529 = vmax.f32 %v493, 0.0
  %v530 = vmax.f32 %v494, 0.0
  %v531 = vmax.f32 %v495, 0.0
  %v532 = vmax.f32 %v496, 0.0
  %v533 = vmax.f32 %v497, 0.0
  %v534 = vmax.f32 %v498, 0.0
  %v535 = vmax.f32 %v499, 0.0
  %v536 = vmax.f32 %v500, 0.0
  %v537 = vmax.f32 %v501, 0.0
  %v538 = vmax.f32 %v502, 0.0
  %v539 = vmax.f32 %v503, 0.0
  %v540 = vmax.f32 %v504, 0.0
  %v541 = vmax.f32 %v505, 0.0
  %v542 = vmax.f32 %v506, 0.0
  %v543 = vmax.f32 %v507, 0.0
  %v544 = vmax.f32 %v508, 0.0
  %v545 = vmax.f32 %v509, 0.0
  %v546 = vmax.f32 %v510, 0.0
  %v547 = vmax.f32 %v511, 0.0
  %v548 = vmax.f32 %v512, 0.0
  %v549 = vmax.f32 %v513, 0.0
  %v550 = vmax.f32 %v514, 0.0
  %v551 = vmax.f32 %v515, 0.0
  %v552 = vmax.f32 %v516, 0.0
  %v553 = vmax.f32 %v517, 0.0
  %v554 = vmax.f32 %v518, 0.0
  %v555 = vadd.f32 %v519, 0.001
  %v556 = vadd.f32 %v520, 0.001
  %v557 = vadd.f32 %v521, 0.001
  %v558 = vadd.f32 %v522, 0.001
  %v559 = vadd.f32 %v523, 0.001
  %v560 = vadd.f32 %v524, 0.001
  %v561 = vadd.f32 %v525, 0.001
  %v562 = vadd.f32 %v526, 0.001
  %v563 = vadd.f32 %v527, 0.001
  %v564 = vadd.f32 %v528, 0.001
  %v565 = vadd.f32 %v529, 0.001
  %v566 = vadd.f32 %v530, 0.001
  %v567 = vadd.f32 %v531, 0.001
  %v568 = vadd.f32 %v532, 0.001
  %v569 = vadd.f32 %v533, 0.001
  %v570 = vadd.f32 %v534, 0.001
  %v571 = vadd.f32 %v535, 0.001
  %v572 = vadd.f32 %v536, 0.001
  %v573 = vadd.f32 %v537, 0.001
  %v574 = vadd.f32 %v538, 0.001
  %v575 = vadd.f32 %v539, 0.001
  %v576 = vadd.f32 %v540, 0.001
  %v577 = vadd.f32 %v541, 0.001
  %v578 = vadd.f32 %v542, 0.001
  %v579 = vadd.f32 %v543, 0.001
  %v580 = vadd.f32 %v544, 0.001
  %v581 = vadd.f32 %v545, 0.001
  %v582 = vadd.f32 %v546, 0.001
  %v583 = vadd.f32 %v547, 0.001
  %v584 = vadd.f32 %v548, 0.001
  %v585 = vadd.f32 %v549, 0.001
  %v586 = vadd.f32 %v550, 0.001
  %v587 = vadd.f32 %v551, 0.001
  %v588 = vadd.f32 %v552, 0.001
  %v589 = vadd.f32 %v553, 0.001
  %v590 = vadd.f32 %v554, 0.001
  %v591 = vrsqrt.pop %v555
  %v592 = vrsqrt.pop %v556
  %v593 = vrsqrt.pop %v557
  %v594 = vrsqrt.pop %v558
  %v595 = vrsqrt.pop %v559
  %v596 = vrsqrt.pop %v560
  %v597 = vrsqrt.pop %v561
  %v598 = vrsqrt.pop %v562
  %v599 = vrsqrt.pop %v563
  %v600 = vrsqrt.pop %v564
  %v601 = vrsqrt.pop %v565
  %v602 = vrsqrt.pop %v566
  %v603 = vrsqrt.pop %v567
  %v604 = vrsqrt.pop %v568
  %v605 = vrsqrt.pop %v569
  %v606 = vrsqrt.pop %v570
  %v607 = vrsqrt.pop %v571
  %v608 = vrsqrt.pop %v572
  %v609 = vrsqrt.pop %v573
  %v610 = vrsqrt.pop %v574
  %v611 = vrsqrt.pop %v575
  %v612 = vrsqrt.pop %v576
  %v613 = vrsqrt.pop %v577
  %v614 = vrsqrt.pop %v578
  %v615 = vrsqrt.pop %v579
  %v616 = vrsqrt.pop %v580
  %v617 = vrsqrt.pop %v581
  %v618 = vrsqrt.pop %v582
  %v619 = vrsqrt.pop %v583
  %v620 = vrsqrt.pop %v584
  %v621 = vrsqrt.pop %v585
  %v622 = vrsqrt.pop %v586
  %v623 = vrsqrt.pop %v587
  %v624 = vrsqrt.pop %v588
  %v625 = vrsqrt.pop %v589
  %v626 = vrsqrt.pop %v590
  %v627 = vld [vmem:[%s1] sm:$0x7]
  %v629 = vlaneseq
  %v630 = vshrl.u32 %v629, 7
  %v631 = vsub.s32 0, %v630
  %v632 = vrot.slane %v627, %v631
  %v633 = vlaneseq
  %v634 = vshrl.u32 %v633, 7
  %v635 = vsub.s32 1, %v634
  %v636 = vrot.slane %v627, %v635
  %v637 = vlaneseq
  %v638 = vshrl.u32 %v637, 7
  %v639 = vsub.s32 2, %v638
  %v640 = vrot.slane %v627, %v639
  %644 = vxpose.xlu0.b32.start [1/16] %v632, 128
  %645 = vxpose.xlu0.b32.cont [2/16] 0.0, 128
  %646 = vxpose.xlu0.b32.cont [3/16] 0.0, 128
  %647 = vxpose.xlu0.b32.cont [4/16] 0.0, 128
  %648 = vxpose.xlu0.b32.cont [5/16] 0.0, 128
  %649 = vxpose.xlu0.b32.cont [6/16] 0.0, 128
  %650 = vxpose.xlu0.b32.cont [7/16] 0.0, 128
  %651 = vxpose.xlu0.b32.cont [8/16] 0.0, 128
  %652 = vxpose.xlu0.b32.cont [9/16] 0.0, 128
  %653 = vxpose.xlu0.b32.cont [10/16] 0.0, 128
  %654 = vxpose.xlu0.b32.cont [11/16] 0.0, 128
  %655 = vxpose.xlu0.b32.cont [12/16] 0.0, 128
  %656 = vxpose.xlu0.b32.cont [13/16] 0.0, 128
  %657 = vxpose.xlu0.b32.cont [14/16] 0.0, 128
  %658 = vxpose.xlu0.b32.cont [15/16] 0.0, 128
  %659 = vxpose.xlu0.b32.end [16/16] 0.0, 128
  %v660 = vpop.trf.xlu0
  %v661 = vpop.trf.xlu0
  %v662 = vpop.trf.xlu0
  %v663 = vpop.trf.xlu0
  %v664 = vpop.trf.xlu0
  %v665 = vpop.trf.xlu0
  %v666 = vpop.trf.xlu0
  %v667 = vpop.trf.xlu0
  %v668 = vpop.trf.xlu0
  %v669 = vpop.trf.xlu0
  %v670 = vpop.trf.xlu0
  %v671 = vpop.trf.xlu0
  %v672 = vpop.trf.xlu0
  %v673 = vpop.trf.xlu0
  %v674 = vpop.trf.xlu0
  %v675 = vpop.trf.xlu0
  %676 = vxpose.xlu0.b32.start [1/16] %v636, 128
  %677 = vxpose.xlu0.b32.cont [2/16] 0.0, 128
  %678 = vxpose.xlu0.b32.cont [3/16] 0.0, 128
  %679 = vxpose.xlu0.b32.cont [4/16] 0.0, 128
  %680 = vxpose.xlu0.b32.cont [5/16] 0.0, 128
  %681 = vxpose.xlu0.b32.cont [6/16] 0.0, 128
  %682 = vxpose.xlu0.b32.cont [7/16] 0.0, 128
  %683 = vxpose.xlu0.b32.cont [8/16] 0.0, 128
  %684 = vxpose.xlu0.b32.cont [9/16] 0.0, 128
  %685 = vxpose.xlu0.b32.cont [10/16] 0.0, 128
  %686 = vxpose.xlu0.b32.cont [11/16] 0.0, 128
  %687 = vxpose.xlu0.b32.cont [12/16] 0.0, 128
  %688 = vxpose.xlu0.b32.cont [13/16] 0.0, 128
  %689 = vxpose.xlu0.b32.cont [14/16] 0.0, 128
  %690 = vxpose.xlu0.b32.cont [15/16] 0.0, 128
  %691 = vxpose.xlu0.b32.end [16/16] 0.0, 128
  %v692 = vpop.trf.xlu0
  %v693 = vpop.trf.xlu0
  %v694 = vpop.trf.xlu0
  %v695 = vpop.trf.xlu0
  %v696 = vpop.trf.xlu0
  %v697 = vpop.trf.xlu0
  %v698 = vpop.trf.xlu0
  %v699 = vpop.trf.xlu0
  %v700 = vpop.trf.xlu0
  %v701 = vpop.trf.xlu0
  %v702 = vpop.trf.xlu0
  %v703 = vpop.trf.xlu0
  %v704 = vpop.trf.xlu0
  %v705 = vpop.trf.xlu0
  %v706 = vpop.trf.xlu0
  %v707 = vpop.trf.xlu0
  %708 = vxpose.xlu0.b32.start [1/16] %v640, 128
  %709 = vxpose.xlu0.b32.cont [2/16] 0.0, 128
  %710 = vxpose.xlu0.b32.cont [3/16] 0.0, 128
  %711 = vxpose.xlu0.b32.cont [4/16] 0.0, 128
  %712 = vxpose.xlu0.b32.cont [5/16] 0.0, 128
  %713 = vxpose.xlu0.b32.cont [6/16] 0.0, 128
  %714 = vxpose.xlu0.b32.cont [7/16] 0.0, 128
  %715 = vxpose.xlu0.b32.cont [8/16] 0.0, 128
  %716 = vxpose.xlu0.b32.cont [9/16] 0.0, 128
  %717 = vxpose.xlu0.b32.cont [10/16] 0.0, 128
  %718 = vxpose.xlu0.b32.cont [11/16] 0.0, 128
  %719 = vxpose.xlu0.b32.cont [12/16] 0.0, 128
  %720 = vxpose.xlu0.b32.cont [13/16] 0.0, 128
  %721 = vxpose.xlu0.b32.cont [14/16] 0.0, 128
  %722 = vxpose.xlu0.b32.cont [15/16] 0.0, 128
  %723 = vxpose.xlu0.b32.end [16/16] 0.0, 128
  %v724 = vpop.trf.xlu0
  %v725 = vpop.trf.xlu0
  %v726 = vpop.trf.xlu0
  %v727 = vpop.trf.xlu0
  %v728 = vpop.trf.xlu0
  %v729 = vpop.trf.xlu0
  %v730 = vpop.trf.xlu0
  %v731 = vpop.trf.xlu0
  %v732 = vpop.trf.xlu0
  %v733 = vpop.trf.xlu0
  %v734 = vpop.trf.xlu0
  %v735 = vpop.trf.xlu0
  %v736 = vpop.trf.xlu0
  %v737 = vpop.trf.xlu0
  %v738 = vpop.trf.xlu0
  %v739 = vpop.trf.xlu0
  %v740 = vld [vmem:[%s2] sm:$0x7]
  %v742 = vlaneseq
  %v743 = vshrl.u32 %v742, 7
  %v744 = vsub.s32 0, %v743
  %v745 = vrot.slane %v740, %v744
  %v746 = vlaneseq
  %v747 = vshrl.u32 %v746, 7
  %v748 = vsub.s32 1, %v747
  %v749 = vrot.slane %v740, %v748
  %v750 = vlaneseq
  %v751 = vshrl.u32 %v750, 7
  %v752 = vsub.s32 2, %v751
  %v753 = vrot.slane %v740, %v752
  %757 = vxpose.xlu0.b32.start [1/16] %v745, 128
  %758 = vxpose.xlu0.b32.cont [2/16] 0.0, 128
  %759 = vxpose.xlu0.b32.cont [3/16] 0.0, 128
  %760 = vxpose.xlu0.b32.cont [4/16] 0.0, 128
  %761 = vxpose.xlu0.b32.cont [5/16] 0.0, 128
  %762 = vxpose.xlu0.b32.cont [6/16] 0.0, 128
  %763 = vxpose.xlu0.b32.cont [7/16] 0.0, 128
  %764 = vxpose.xlu0.b32.cont [8/16] 0.0, 128
  %765 = vxpose.xlu0.b32.cont [9/16] 0.0, 128
  %766 = vxpose.xlu0.b32.cont [10/16] 0.0, 128
  %767 = vxpose.xlu0.b32.cont [11/16] 0.0, 128
  %768 = vxpose.xlu0.b32.cont [12/16] 0.0, 128
  %769 = vxpose.xlu0.b32.cont [13/16] 0.0, 128
  %770 = vxpose.xlu0.b32.cont [14/16] 0.0, 128
  %771 = vxpose.xlu0.b32.cont [15/16] 0.0, 128
  %772 = vxpose.xlu0.b32.end [16/16] 0.0, 128
  %v773 = vpop.trf.xlu0
  %v774 = vpop.trf.xlu0
  %v775 = vpop.trf.xlu0
  %v776 = vpop.trf.xlu0
  %v777 = vpop.trf.xlu0
  %v778 = vpop.trf.xlu0
  %v779 = vpop.trf.xlu0
  %v780 = vpop.trf.xlu0
  %v781 = vpop.trf.xlu0
  %v782 = vpop.trf.xlu0
  %v783 = vpop.trf.xlu0
  %v784 = vpop.trf.xlu0
  %v785 = vpop.trf.xlu0
  %v786 = vpop.trf.xlu0
  %v787 = vpop.trf.xlu0
  %v788 = vpop.trf.xlu0
  %789 = vxpose.xlu0.b32.start [1/16] %v749, 128
  %790 = vxpose.xlu0.b32.cont [2/16] 0.0, 128
  %791 = vxpose.xlu0.b32.cont [3/16] 0.0, 128
  %792 = vxpose.xlu0.b32.cont [4/16] 0.0, 128
  %793 = vxpose.xlu0.b32.cont [5/16] 0.0, 128
  %794 = vxpose.xlu0.b32.cont [6/16] 0.0, 128
  %795 = vxpose.xlu0.b32.cont [7/16] 0.0, 128
  %796 = vxpose.xlu0.b32.cont [8/16] 0.0, 128
  %797 = vxpose.xlu0.b32.cont [9/16] 0.0, 128
  %798 = vxpose.xlu0.b32.cont [10/16] 0.0, 128
  %799 = vxpose.xlu0.b32.cont [11/16] 0.0, 128
  %800 = vxpose.xlu0.b32.cont [12/16] 0.0, 128
  %801 = vxpose.xlu0.b32.cont [13/16] 0.0, 128
  %802 = vxpose.xlu0.b32.cont [14/16] 0.0, 128
  %803 = vxpose.xlu0.b32.cont [15/16] 0.0, 128
  %804 = vxpose.xlu0.b32.end [16/16] 0.0, 128
  %v805 = vpop.trf.xlu0
  %v806 = vpop.trf.xlu0
  %v807 = vpop.trf.xlu0
  %v808 = vpop.trf.xlu0
  %v809 = vpop.trf.xlu0
  %v810 = vpop.trf.xlu0
  %v811 = vpop.trf.xlu0
  %v812 = vpop.trf.xlu0
  %v813 = vpop.trf.xlu0
  %v814 = vpop.trf.xlu0
  %v815 = vpop.trf.xlu0
  %v816 = vpop.trf.xlu0
  %v817 = vpop.trf.xlu0
  %v818 = vpop.trf.xlu0
  %v819 = vpop.trf.xlu0
  %v820 = vpop.trf.xlu0
  %821 = vxpose.xlu0.b32.start [1/16] %v753, 128
  %822 = vxpose.xlu0.b32.cont [2/16] 0.0, 128
  %823 = vxpose.xlu0.b32.cont [3/16] 0.0, 128
  %824 = vxpose.xlu0.b32.cont [4/16] 0.0, 128
  %825 = vxpose.xlu0.b32.cont [5/16] 0.0, 128
  %826 = vxpose.xlu0.b32.cont [6/16] 0.0, 128
  %827 = vxpose.xlu0.b32.cont [7/16] 0.0, 128
  %828 = vxpose.xlu0.b32.cont [8/16] 0.0, 128
  %829 = vxpose.xlu0.b32.cont [9/16] 0.0, 128
  %830 = vxpose.xlu0.b32.cont [10/16] 0.0, 128
  %831 = vxpose.xlu0.b32.cont [11/16] 0.0, 128
  %832 = vxpose.xlu0.b32.cont [12/16] 0.0, 128
  %833 = vxpose.xlu0.b32.cont [13/16] 0.0, 128
  %834 = vxpose.xlu0.b32.cont [14/16] 0.0, 128
  %835 = vxpose.xlu0.b32.cont [15/16] 0.0, 128
  %836 = vxpose.xlu0.b32.end [16/16] 0.0, 128
  %v837 = vpop.trf.xlu0
  %v838 = vpop.trf.xlu0
  %v839 = vpop.trf.xlu0
  %v840 = vpop.trf.xlu0
  %v841 = vpop.trf.xlu0
  %v842 = vpop.trf.xlu0
  %v843 = vpop.trf.xlu0
  %v844 = vpop.trf.xlu0
  %v845 = vpop.trf.xlu0
  %v846 = vpop.trf.xlu0
  %v847 = vpop.trf.xlu0
  %v848 = vpop.trf.xlu0
  %v849 = vpop.trf.xlu0
  %v850 = vpop.trf.xlu0
  %v851 = vpop.trf.xlu0
  %v852 = vpop.trf.xlu0
  %v853 = vmul.f32 %v591, %v660
  %v854 = vmul.f32 %v592, %v661
  %v855 = vmul.f32 %v593, %v662
  %v856 = vmul.f32 %v594, %v663
  %v857 = vmul.f32 %v595, %v664
  %v858 = vmul.f32 %v596, %v665
  %v859 = vmul.f32 %v597, %v666
  %v860 = vmul.f32 %v598, %v667
  %v861 = vmul.f32 %v599, %v668
  %v862 = vmul.f32 %v600, %v669
  %v863 = vmul.f32 %v601, %v670
  %v864 = vmul.f32 %v602, %v671
  %v865 = vmul.f32 %v603, %v672
  %v866 = vmul.f32 %v604, %v673
  %v867 = vmul.f32 %v605, %v674
  %v868 = vmul.f32 %v606, %v675
  %v869 = vmul.f32 %v607, %v692
  %v870 = vmul.f32 %v608, %v693
  %v871 = vmul.f32 %v609, %v694
  %v872 = vmul.f32 %v610, %v695
  %v873 = vmul.f32 %v611, %v696
  %v874 = vmul.f32 %v612, %v697
  %v875 = vmul.f32 %v613, %v698
  %v876 = vmul.f32 %v614, %v699
  %v877 = vmul.f32 %v615, %v700
  %v878 = vmul.f32 %v616, %v701
  %v879 = vmul.f32 %v617, %v702
  %v880 = vmul.f32 %v618, %v703
  %v881 = vmul.f32 %v619, %v704
  %v882 = vmul.f32 %v620, %v705
  %v883 = vmul.f32 %v621, %v706
  %v884 = vmul.f32 %v622, %v707
  %v885 = vmul.f32 %v623, %v724
  %v886 = vmul.f32 %v624, %v725
  %v887 = vmul.f32 %v625, %v726
  %v888 = vmul.f32 %v626, %v727
  %v889 = vmul.f32 %v267, %v853
  %v890 = vmul.f32 %v268, %v854
  %v891 = vmul.f32 %v269, %v855
  %v892 = vmul.f32 %v270, %v856
  %v893 = vmul.f32 %v271, %v857
  %v894 = vmul.f32 %v272, %v858
  %v895 = vmul.f32 %v273, %v859
  %v896 = vmul.f32 %v274, %v860
  %v897 = vmul.f32 %v275, %v861
  %v898 = vmul.f32 %v276, %v862
  %v899 = vmul.f32 %v277, %v863
  %v900 = vmul.f32 %v278, %v864
  %v901 = vmul.f32 %v279, %v865
  %v902 = vmul.f32 %v280, %v866
  %v903 = vmul.f32 %v281, %v867
  %v904 = vmul.f32 %v282, %v868
  %v905 = vmul.f32 %v283, %v869
  %v906 = vmul.f32 %v284, %v870
  %v907 = vmul.f32 %v285, %v871
  %v908 = vmul.f32 %v286, %v872
  %v909 = vmul.f32 %v287, %v873
  %v910 = vmul.f32 %v288, %v874
  %v911 = vmul.f32 %v289, %v875
  %v912 = vmul.f32 %v290, %v876
  %v913 = vmul.f32 %v291, %v877
  %v914 = vmul.f32 %v292, %v878
  %v915 = vmul.f32 %v293, %v879
  %v916 = vmul.f32 %v294, %v880
  %v917 = vmul.f32 %v295, %v881
  %v918 = vmul.f32 %v296, %v882
  %v919 = vmul.f32 %v297, %v883
  %v920 = vmul.f32 %v298, %v884
  %v921 = vmul.f32 %v299, %v885
  %v922 = vmul.f32 %v300, %v886
  %v923 = vmul.f32 %v301, %v887
  %v924 = vmul.f32 %v302, %v888
  %v925 = vsub.f32 %v773, %v889
  %v926 = vsub.f32 %v774, %v890
  %v927 = vsub.f32 %v775, %v891
  %v928 = vsub.f32 %v776, %v892
  %v929 = vsub.f32 %v777, %v893
  %v930 = vsub.f32 %v778, %v894
  %v931 = vsub.f32 %v779, %v895
  %v932 = vsub.f32 %v780, %v896
  %v933 = vsub.f32 %v781, %v897
  %v934 = vsub.f32 %v782, %v898
  %v935 = vsub.f32 %v783, %v899
  %v936 = vsub.f32 %v784, %v900
  %v937 = vsub.f32 %v785, %v901
  %v938 = vsub.f32 %v786, %v902
  %v939 = vsub.f32 %v787, %v903
  %v940 = vsub.f32 %v788, %v904
  %v941 = vsub.f32 %v805, %v905
  %v942 = vsub.f32 %v806, %v906
  %v943 = vsub.f32 %v807, %v907
  %v944 = vsub.f32 %v808, %v908
  %v945 = vsub.f32 %v809, %v909
  %v946 = vsub.f32 %v810, %v910
  %v947 = vsub.f32 %v811, %v911
  %v948 = vsub.f32 %v812, %v912
  %v949 = vsub.f32 %v813, %v913
  %v950 = vsub.f32 %v814, %v914
  %v951 = vsub.f32 %v815, %v915
  %v952 = vsub.f32 %v816, %v916
  %v953 = vsub.f32 %v817, %v917
  %v954 = vsub.f32 %v818, %v918
  %v955 = vsub.f32 %v819, %v919
  %v956 = vsub.f32 %v820, %v920
  %v957 = vsub.f32 %v837, %v921
  %v958 = vsub.f32 %v838, %v922
  %v959 = vsub.f32 %v839, %v923
  %v960 = vsub.f32 %v840, %v924
  %962 = vset.pattern.permute.xlu0 0
  %963 = vperm.xlu0 %962, %v853
  %v964 = vpop.permute.xlu0 %963
  %967 = vset.pattern.permute.xlu0 0
  %968 = vperm.xlu0 %967, %v854
  %v969 = vpop.permute.xlu0 %968
  %972 = vset.pattern.permute.xlu0 0
  %973 = vperm.xlu0 %972, %v855
  %v974 = vpop.permute.xlu0 %973
  %977 = vset.pattern.permute.xlu0 0
  %978 = vperm.xlu0 %977, %v856
  %v979 = vpop.permute.xlu0 %978
  %982 = vset.pattern.permute.xlu0 0
  %983 = vperm.xlu0 %982, %v857
  %v984 = vpop.permute.xlu0 %983
  %987 = vset.pattern.permute.xlu0 0
  %988 = vperm.xlu0 %987, %v858
  %v989 = vpop.permute.xlu0 %988
  %992 = vset.pattern.permute.xlu0 0
  %993 = vperm.xlu0 %992, %v859
  %v994 = vpop.permute.xlu0 %993
  %997 = vset.pattern.permute.xlu0 0
  %998 = vperm.xlu0 %997, %v860
  %v999 = vpop.permute.xlu0 %998
  %1002 = vset.pattern.permute.xlu0 0
  %1003 = vperm.xlu0 %1002, %v861
  %v1004 = vpop.permute.xlu0 %1003
  %1007 = vset.pattern.permute.xlu0 0
  %1008 = vperm.xlu0 %1007, %v862
  %v1009 = vpop.permute.xlu0 %1008
  %1012 = vset.pattern.permute.xlu0 0
  %1013 = vperm.xlu0 %1012, %v863
  %v1014 = vpop.permute.xlu0 %1013
  %1017 = vset.pattern.permute.xlu0 0
  %1018 = vperm.xlu0 %1017, %v864
  %v1019 = vpop.permute.xlu0 %1018
  %1022 = vset.pattern.permute.xlu0 0
  %1023 = vperm.xlu0 %1022, %v865
  %v1024 = vpop.permute.xlu0 %1023
  %1027 = vset.pattern.permute.xlu0 0
  %1028 = vperm.xlu0 %1027, %v866
  %v1029 = vpop.permute.xlu0 %1028
  %1032 = vset.pattern.permute.xlu0 0
  %1033 = vperm.xlu0 %1032, %v867
  %v1034 = vpop.permute.xlu0 %1033
  %1037 = vset.pattern.permute.xlu0 0
  %1038 = vperm.xlu0 %1037, %v868
  %v1039 = vpop.permute.xlu0 %1038
  %1042 = vset.pattern.permute.xlu0 0
  %1043 = vperm.xlu0 %1042, %v869
  %v1044 = vpop.permute.xlu0 %1043
  %1047 = vset.pattern.permute.xlu0 0
  %1048 = vperm.xlu0 %1047, %v870
  %v1049 = vpop.permute.xlu0 %1048
  %1052 = vset.pattern.permute.xlu0 0
  %1053 = vperm.xlu0 %1052, %v871
  %v1054 = vpop.permute.xlu0 %1053
  %1057 = vset.pattern.permute.xlu0 0
  %1058 = vperm.xlu0 %1057, %v872
  %v1059 = vpop.permute.xlu0 %1058
  %1062 = vset.pattern.permute.xlu0 0
  %1063 = vperm.xlu0 %1062, %v873
  %v1064 = vpop.permute.xlu0 %1063
  %1067 = vset.pattern.permute.xlu0 0
  %1068 = vperm.xlu0 %1067, %v874
  %v1069 = vpop.permute.xlu0 %1068
  %1072 = vset.pattern.permute.xlu0 0
  %1073 = vperm.xlu0 %1072, %v875
  %v1074 = vpop.permute.xlu0 %1073
  %1077 = vset.pattern.permute.xlu0 0
  %1078 = vperm.xlu0 %1077, %v876
  %v1079 = vpop.permute.xlu0 %1078
  %1082 = vset.pattern.permute.xlu0 0
  %1083 = vperm.xlu0 %1082, %v877
  %v1084 = vpop.permute.xlu0 %1083
  %1087 = vset.pattern.permute.xlu0 0
  %1088 = vperm.xlu0 %1087, %v878
  %v1089 = vpop.permute.xlu0 %1088
  %1092 = vset.pattern.permute.xlu0 0
  %1093 = vperm.xlu0 %1092, %v879
  %v1094 = vpop.permute.xlu0 %1093
  %1097 = vset.pattern.permute.xlu0 0
  %1098 = vperm.xlu0 %1097, %v880
  %v1099 = vpop.permute.xlu0 %1098
  %1102 = vset.pattern.permute.xlu0 0
  %1103 = vperm.xlu0 %1102, %v881
  %v1104 = vpop.permute.xlu0 %1103
  %1107 = vset.pattern.permute.xlu0 0
  %1108 = vperm.xlu0 %1107, %v882
  %v1109 = vpop.permute.xlu0 %1108
  %1112 = vset.pattern.permute.xlu0 0
  %1113 = vperm.xlu0 %1112, %v883
  %v1114 = vpop.permute.xlu0 %1113
  %1117 = vset.pattern.permute.xlu0 0
  %1118 = vperm.xlu0 %1117, %v884
  %v1119 = vpop.permute.xlu0 %1118
  %1122 = vset.pattern.permute.xlu0 0
  %1123 = vperm.xlu0 %1122, %v885
  %v1124 = vpop.permute.xlu0 %1123
  %1127 = vset.pattern.permute.xlu0 0
  %1128 = vperm.xlu0 %1127, %v886
  %v1129 = vpop.permute.xlu0 %1128
  %1132 = vset.pattern.permute.xlu0 0
  %1133 = vperm.xlu0 %1132, %v887
  %v1134 = vpop.permute.xlu0 %1133
  %1137 = vset.pattern.permute.xlu0 0
  %1138 = vperm.xlu0 %1137, %v888
  %v1139 = vpop.permute.xlu0 %1138
  %v1141 = vmul.f32 %v14, %v964
  %v1142 = vmul.f32 %v15, %v969
  %v1143 = vmul.f32 %v16, %v974
  %v1144 = vmul.f32 %v17, %v979
  %v1145 = vmul.f32 %v18, %v984
  %v1146 = vmul.f32 %v19, %v989
  %v1147 = vmul.f32 %v20, %v994
  %v1148 = vmul.f32 %v21, %v999
  %v1149 = vmul.f32 %v22, %v1004
  %v1150 = vmul.f32 %v23, %v1009
  %v1151 = vmul.f32 %v24, %v1014
  %v1152 = vmul.f32 %v25, %v1019
  %v1153 = vmul.f32 %v26, %v1024
  %v1154 = vmul.f32 %v27, %v1029
  %v1155 = vmul.f32 %v28, %v1034
  %v1156 = vmul.f32 %v29, %v1039
  %v1157 = vmul.f32 %v30, %v1044
  %v1158 = vmul.f32 %v31, %v1049
  %v1159 = vmul.f32 %v32, %v1054
  %v1160 = vmul.f32 %v33, %v1059
  %v1161 = vmul.f32 %v34, %v1064
  %v1162 = vmul.f32 %v35, %v1069
  %v1163 = vmul.f32 %v36, %v1074
  %v1164 = vmul.f32 %v37, %v1079
  %v1165 = vmul.f32 %v38, %v1084
  %v1166 = vmul.f32 %v39, %v1089
  %v1167 = vmul.f32 %v40, %v1094
  %v1168 = vmul.f32 %v41, %v1099
  %v1169 = vmul.f32 %v42, %v1104
  %v1170 = vmul.f32 %v43, %v1109
  %v1171 = vmul.f32 %v44, %v1114
  %v1172 = vmul.f32 %v45, %v1119
  %v1173 = vmul.f32 %v46, %v1124
  %v1174 = vmul.f32 %v47, %v1129
  %v1175 = vmul.f32 %v48, %v1134
  %v1176 = vmul.f32 %v49, %v1139
  %1178 = vset.pattern.permute.xlu0 0
  %1179 = vperm.xlu0 %1178, %v925
  %v1180 = vpop.permute.xlu0 %1179
  %1183 = vset.pattern.permute.xlu0 0
  %1184 = vperm.xlu0 %1183, %v926
  %v1185 = vpop.permute.xlu0 %1184
  %1188 = vset.pattern.permute.xlu0 0
  %1189 = vperm.xlu0 %1188, %v927
  %v1190 = vpop.permute.xlu0 %1189
  %1193 = vset.pattern.permute.xlu0 0
  %1194 = vperm.xlu0 %1193, %v928
  %v1195 = vpop.permute.xlu0 %1194
  %1198 = vset.pattern.permute.xlu0 0
  %1199 = vperm.xlu0 %1198, %v929
  %v1200 = vpop.permute.xlu0 %1199
  %1203 = vset.pattern.permute.xlu0 0
  %1204 = vperm.xlu0 %1203, %v930
  %v1205 = vpop.permute.xlu0 %1204
  %1208 = vset.pattern.permute.xlu0 0
  %1209 = vperm.xlu0 %1208, %v931
  %v1210 = vpop.permute.xlu0 %1209
  %1213 = vset.pattern.permute.xlu0 0
  %1214 = vperm.xlu0 %1213, %v932
  %v1215 = vpop.permute.xlu0 %1214
  %1218 = vset.pattern.permute.xlu0 0
  %1219 = vperm.xlu0 %1218, %v933
  %v1220 = vpop.permute.xlu0 %1219
  %1223 = vset.pattern.permute.xlu0 0
  %1224 = vperm.xlu0 %1223, %v934
  %v1225 = vpop.permute.xlu0 %1224
  %1228 = vset.pattern.permute.xlu0 0
  %1229 = vperm.xlu0 %1228, %v935
  %v1230 = vpop.permute.xlu0 %1229
  %1233 = vset.pattern.permute.xlu0 0
  %1234 = vperm.xlu0 %1233, %v936
  %v1235 = vpop.permute.xlu0 %1234
  %1238 = vset.pattern.permute.xlu0 0
  %1239 = vperm.xlu0 %1238, %v937
  %v1240 = vpop.permute.xlu0 %1239
  %1243 = vset.pattern.permute.xlu0 0
  %1244 = vperm.xlu0 %1243, %v938
  %v1245 = vpop.permute.xlu0 %1244
  %1248 = vset.pattern.permute.xlu0 0
  %1249 = vperm.xlu0 %1248, %v939
  %v1250 = vpop.permute.xlu0 %1249
  %1253 = vset.pattern.permute.xlu0 0
  %1254 = vperm.xlu0 %1253, %v940
  %v1255 = vpop.permute.xlu0 %1254
  %1258 = vset.pattern.permute.xlu0 0
  %1259 = vperm.xlu0 %1258, %v941
  %v1260 = vpop.permute.xlu0 %1259
  %1263 = vset.pattern.permute.xlu0 0
  %1264 = vperm.xlu0 %1263, %v942
  %v1265 = vpop.permute.xlu0 %1264
  %1268 = vset.pattern.permute.xlu0 0
  %1269 = vperm.xlu0 %1268, %v943
  %v1270 = vpop.permute.xlu0 %1269
  %1273 = vset.pattern.permute.xlu0 0
  %1274 = vperm.xlu0 %1273, %v944
  %v1275 = vpop.permute.xlu0 %1274
  %1278 = vset.pattern.permute.xlu0 0
  %1279 = vperm.xlu0 %1278, %v945
  %v1280 = vpop.permute.xlu0 %1279
  %1283 = vset.pattern.permute.xlu0 0
  %1284 = vperm.xlu0 %1283, %v946
  %v1285 = vpop.permute.xlu0 %1284
  %1288 = vset.pattern.permute.xlu0 0
  %1289 = vperm.xlu0 %1288, %v947
  %v1290 = vpop.permute.xlu0 %1289
  %1293 = vset.pattern.permute.xlu0 0
  %1294 = vperm.xlu0 %1293, %v948
  %v1295 = vpop.permute.xlu0 %1294
  %1298 = vset.pattern.permute.xlu0 0
  %1299 = vperm.xlu0 %1298, %v949
  %v1300 = vpop.permute.xlu0 %1299
  %1303 = vset.pattern.permute.xlu0 0
  %1304 = vperm.xlu0 %1303, %v950
  %v1305 = vpop.permute.xlu0 %1304
  %1308 = vset.pattern.permute.xlu0 0
  %1309 = vperm.xlu0 %1308, %v951
  %v1310 = vpop.permute.xlu0 %1309
  %1313 = vset.pattern.permute.xlu0 0
  %1314 = vperm.xlu0 %1313, %v952
  %v1315 = vpop.permute.xlu0 %1314
  %1318 = vset.pattern.permute.xlu0 0
  %1319 = vperm.xlu0 %1318, %v953
  %v1320 = vpop.permute.xlu0 %1319
  %1323 = vset.pattern.permute.xlu0 0
  %1324 = vperm.xlu0 %1323, %v954
  %v1325 = vpop.permute.xlu0 %1324
  %1328 = vset.pattern.permute.xlu0 0
  %1329 = vperm.xlu0 %1328, %v955
  %v1330 = vpop.permute.xlu0 %1329
  %1333 = vset.pattern.permute.xlu0 0
  %1334 = vperm.xlu0 %1333, %v956
  %v1335 = vpop.permute.xlu0 %1334
  %1338 = vset.pattern.permute.xlu0 0
  %1339 = vperm.xlu0 %1338, %v957
  %v1340 = vpop.permute.xlu0 %1339
  %1343 = vset.pattern.permute.xlu0 0
  %1344 = vperm.xlu0 %1343, %v958
  %v1345 = vpop.permute.xlu0 %1344
  %1348 = vset.pattern.permute.xlu0 0
  %1349 = vperm.xlu0 %1348, %v959
  %v1350 = vpop.permute.xlu0 %1349
  %1353 = vset.pattern.permute.xlu0 0
  %1354 = vperm.xlu0 %1353, %v960
  %v1355 = vpop.permute.xlu0 %1354
  %v1357 = vadd.f32 %v1141, %v1180
  %v1358 = vadd.f32 %v1142, %v1185
  %v1359 = vadd.f32 %v1143, %v1190
  %v1360 = vadd.f32 %v1144, %v1195
  %v1361 = vadd.f32 %v1145, %v1200
  %v1362 = vadd.f32 %v1146, %v1205
  %v1363 = vadd.f32 %v1147, %v1210
  %v1364 = vadd.f32 %v1148, %v1215
  %v1365 = vadd.f32 %v1149, %v1220
  %v1366 = vadd.f32 %v1150, %v1225
  %v1367 = vadd.f32 %v1151, %v1230
  %v1368 = vadd.f32 %v1152, %v1235
  %v1369 = vadd.f32 %v1153, %v1240
  %v1370 = vadd.f32 %v1154, %v1245
  %v1371 = vadd.f32 %v1155, %v1250
  %v1372 = vadd.f32 %v1156, %v1255
  %v1373 = vadd.f32 %v1157, %v1260
  %v1374 = vadd.f32 %v1158, %v1265
  %v1375 = vadd.f32 %v1159, %v1270
  %v1376 = vadd.f32 %v1160, %v1275
  %v1377 = vadd.f32 %v1161, %v1280
  %v1378 = vadd.f32 %v1162, %v1285
  %v1379 = vadd.f32 %v1163, %v1290
  %v1380 = vadd.f32 %v1164, %v1295
  %v1381 = vadd.f32 %v1165, %v1300
  %v1382 = vadd.f32 %v1166, %v1305
  %v1383 = vadd.f32 %v1167, %v1310
  %v1384 = vadd.f32 %v1168, %v1315
  %v1385 = vadd.f32 %v1169, %v1320
  %v1386 = vadd.f32 %v1170, %v1325
  %v1387 = vadd.f32 %v1171, %v1330
  %v1388 = vadd.f32 %v1172, %v1335
  %v1389 = vadd.f32 %v1173, %v1340
  %v1390 = vadd.f32 %v1174, %v1345
  %v1391 = vadd.f32 %v1175, %v1350
  %v1392 = vadd.f32 %v1176, %v1355
  %1393 = vst.msk [vmem:[%s3] sm:$0xff] %vm158, %v1357
  %1394 = vst.msk [vmem:[%s3 + $0x8] sm:$0xff] %vm158, %v1358
  %1395 = vst.msk [vmem:[%s3 + $0x10] sm:$0xff] %vm158, %v1359
  %1396 = vst.msk [vmem:[%s3 + $0x18] sm:$0xff] %vm158, %v1360
  %1397 = vst.msk [vmem:[%s3 + $0x20] sm:$0xff] %vm158, %v1361
  %1398 = vst.msk [vmem:[%s3 + $0x28] sm:$0xff] %vm158, %v1362
  %1399 = vst.msk [vmem:[%s3 + $0x30] sm:$0xff] %vm158, %v1363
  %1400 = vst.msk [vmem:[%s3 + $0x38] sm:$0xff] %vm158, %v1364
  %1401 = vst.msk [vmem:[%s3 + $0x40] sm:$0xff] %vm158, %v1365
  %1402 = vst.msk [vmem:[%s3 + $0x48] sm:$0xff] %vm158, %v1366
  %1403 = vst.msk [vmem:[%s3 + $0x50] sm:$0xff] %vm158, %v1367
  %1404 = vst.msk [vmem:[%s3 + $0x58] sm:$0xff] %vm158, %v1368
  %1405 = vst.msk [vmem:[%s3 + $0x60] sm:$0xff] %vm158, %v1369
  %1406 = vst.msk [vmem:[%s3 + $0x68] sm:$0xff] %vm158, %v1370
  %1407 = vst.msk [vmem:[%s3 + $0x70] sm:$0xff] %vm158, %v1371
  %1408 = vst.msk [vmem:[%s3 + $0x78] sm:$0xff] %vm158, %v1372
  %1409 = vst.msk [vmem:[%s3 + $0x80] sm:$0xff] %vm158, %v1373
  %1410 = vst.msk [vmem:[%s3 + $0x88] sm:$0xff] %vm158, %v1374
  %1411 = vst.msk [vmem:[%s3 + $0x90] sm:$0xff] %vm158, %v1375
  %1412 = vst.msk [vmem:[%s3 + $0x98] sm:$0xff] %vm158, %v1376
  %1413 = vst.msk [vmem:[%s3 + $0xa0] sm:$0xff] %vm158, %v1377
  %1414 = vst.msk [vmem:[%s3 + $0xa8] sm:$0xff] %vm158, %v1378
  %1415 = vst.msk [vmem:[%s3 + $0xb0] sm:$0xff] %vm158, %v1379
  %1416 = vst.msk [vmem:[%s3 + $0xb8] sm:$0xff] %vm158, %v1380
  %1417 = vst.msk [vmem:[%s3 + $0xc0] sm:$0xff] %vm158, %v1381
  %1418 = vst.msk [vmem:[%s3 + $0xc8] sm:$0xff] %vm158, %v1382
  %1419 = vst.msk [vmem:[%s3 + $0xd0] sm:$0xff] %vm158, %v1383
  %1420 = vst.msk [vmem:[%s3 + $0xd8] sm:$0xff] %vm158, %v1384
  %1421 = vst.msk [vmem:[%s3 + $0xe0] sm:$0xff] %vm158, %v1385
  %1422 = vst.msk [vmem:[%s3 + $0xe8] sm:$0xff] %vm158, %v1386
  %1423 = vst.msk [vmem:[%s3 + $0xf0] sm:$0xff] %vm158, %v1387
  %1424 = vst.msk [vmem:[%s3 + $0xf8] sm:$0xff] %vm158, %v1388
  %1425 = vst.msk [vmem:[%s3 + $0x100] sm:$0xff] %vm158, %v1389
  %1426 = vst.msk [vmem:[%s3 + $0x108] sm:$0xff] %vm158, %v1390
  %1427 = vst.msk [vmem:[%s3 + $0x110] sm:$0xff] %vm158, %v1391
  %1428 = vst.msk [vmem:[%s3 + $0x118] sm:$0xff] %vm158, %v1392
  // Predicated region
  $region14: #{tpu_custom_call.1} parent=0 // pred_check
    _
  $region15: #{tpu_custom_call.1} parent=0 // pred_check_branch
    %1430 = sbr.rel (0) target = $region17
  $region16: #{tpu_custom_call.1} parent=0 // pred_region
    _
  $region17: #{tpu_custom_call.1} parent=0 // pred_fallthru
    _
  // Predicated region
  $region18: #{tpu_custom_call.1} parent=0 // pred_check
    _
  $region19: #{tpu_custom_call.1} parent=0 // pred_check_branch
    %1432 = sbr.rel (0) target = $region21
  $region20: #{tpu_custom_call.1} parent=0 // pred_region
    _
  $region21: #{tpu_custom_call.1} parent=0 // pred_fallthru
    _

</llo_original>
